<compile_context>
chip_gen: v6e
topology: v6e:2x2x1
jax: 0.10.0
libtpu: 0.0.40
codegen_flags: <defaults>
</compile_context>

<pallas_src>
import math

import jax
import jax.numpy as jnp
from jax.experimental import pallas as pl
from jax.experimental.pallas import tpu as pltpu


_LANE = 128                              # TPU lane width (last block dim)
_TARGET_BLOCK_BYTES = 2 * 1024 * 1024    # ~2 MiB blocks


def _round_up(x: int, m: int) -> int:
    return ((x + m - 1) // m) * m


def _drop_path_kernel(scale_ref, x_ref, o_ref):
    """out = x * scale[b] for the current sample b.

    scale_ref : SMEM (B,) float32 (scalar prefetch) -- mask[b] / keep_prob
    x_ref     : VMEM (1, TM, 128) tile of sample b
    o_ref     : VMEM (1, TM, 128) output tile
    """
    b = pl.program_id(0)
    o_ref[...] = (x_ref[...] * scale_ref[b]).astype(o_ref.dtype)


@jax.jit
def _scale_per_sample(x, scale):
    """out[b] = x[b] * scale[b]   (scale broadcast over all non-batch dims)."""
    orig_shape = x.shape
    B = orig_shape[0]
    N = math.prod(orig_shape[1:])
    itemsize = jnp.dtype(x.dtype).itemsize

    # Lane-dense row-major re-layout: (B, N) -> (B, M, 128).
    N_pad = _round_up(max(N, 1), _LANE)
    x_flat = x.reshape(B, N)
    if N_pad != N:
        # TODO(synk): handle the ragged lane tail in-kernel to avoid this extra
        # HBM pass; it only triggers when C*H*W % 128 != 0 (rare in practice).
        x_flat = jnp.pad(x_flat, ((0, 0), (0, N_pad - N)))
    M = N_pad // _LANE
    x3 = x_flat.reshape(B, M, _LANE)

    # Rows per block targeting ~2 MiB; second-to-last block dim is either the
    # full M (always legal) or a multiple of 8.
    rows_target = max(8, _TARGET_BLOCK_BYTES // (_LANE * itemsize))
    if M <= rows_target:
        TM = M
    else:
        TM = _round_up(rows_target, 8)

    grid = (B, pl.cdiv(M, TM))           # ragged last chunk handled by Pallas

    total = B * N
    cost = pl.CostEstimate(
        flops=total, transcendentals=0, bytes_accessed=2 * total * itemsize
    )

    out3 = pl.pallas_call(
        _drop_path_kernel,
        out_shape=jax.ShapeDtypeStruct(x3.shape, x.dtype),
        grid_spec=pltpu.PrefetchScalarGridSpec(
            num_scalar_prefetch=1,                       # `scale` lands in SMEM
            grid=grid,
            in_specs=[pl.BlockSpec((1, TM, _LANE), lambda b, m, s: (b, m, 0))],
            out_specs=pl.BlockSpec((1, TM, _LANE), lambda b, m, s: (b, m, 0)),
        ),
        compiler_params=pltpu.CompilerParams(
            dimension_semantics=("parallel", "parallel")),
        input_output_aliases={1: 0},     # write back in place (no 2nd HBM buf)
        cost_estimate=cost,
    )(scale, x3)

    out_flat = out3.reshape(B, N_pad)
    if N_pad != N:
        out_flat = out_flat[:, :N]
    return out_flat.reshape(orig_shape)


def drop_path(x, drop_prob: float = 0.0, training: bool = False, *, key=None):
    """Pallas stochastic depth, torch semantics:
        mask = floor(keep_prob + U[0,1))       # shape (B, 1, ..., 1)
        out  = x / keep_prob * mask
    """
    if drop_prob == 0.0 or not training:
        return x
    assert key is not None, "need a PRNG key when training with drop_prob > 0"

    keep_prob = 1.0 - drop_prob
    B = x.shape[0]
    u = jax.random.uniform(key, (B,), dtype=jnp.float32)
    mask = jnp.floor(keep_prob + u)                  # 1.0 with prob keep_prob
    scale = (mask / keep_prob).astype(jnp.float32)   # kept f32 in SMEM
    return _scale_per_sample(x, scale)


class DropPath:
    """Drop paths (Stochastic Depth) per sample."""

    def __init__(self, drop_prob=None):
        self.drop_prob = 0.0 if drop_prob is None else float(drop_prob)
        self.training = True

    def __call__(self, x, key=None):
        return drop_path(x, self.drop_prob, self.training, key=key)


if __name__ == "__main__":
    key = jax.random.PRNGKey(0)
    kx, kmask = jax.random.split(key)

    # Small NCHW input consistent with EfficientNet residual-block usage.
    B, C, H, W = 2, 4, 16, 16
    x = jax.random.normal(kx, (B, C, H, W), dtype=jnp.float32)

    module = DropPath(drop_prob=0.5)
    module.training = True
    out = jax.block_until_ready(module(x, key=kmask))

    # Reference (same mask derivation as the kernel wrapper, torch formula).
    keep_prob = 1.0 - module.drop_prob
    u = jax.random.uniform(kmask, (B,), dtype=jnp.float32)
    mask = jnp.floor(keep_prob + u).reshape(B, 1, 1, 1)
    ref = x / keep_prob * mask
    assert jnp.allclose(out, ref, atol=1e-6, rtol=1e-5), "mismatch vs reference"

    # Shape whose flattened per-sample size is NOT a multiple of 128
    # (exercises the lane-padding path), e.g. the 7x7 EfficientNet head.
    x2 = jax.random.normal(kx, (2, 3, 7, 7), dtype=jnp.float32)
    out2 = jax.block_until_ready(drop_path(x2, 0.2, True, key=kmask))
    u2 = jax.random.uniform(kmask, (2,), dtype=jnp.float32)
    mask2 = jnp.floor(0.8 + u2).reshape(2, 1, 1, 1)
    ref2 = x2 / 0.8 * mask2
    assert jnp.allclose(out2, ref2, atol=1e-6, rtol=1e-5), "mismatch (padded path)"

    # bf16 activations (typical training dtype) -- scale stays f32 in SMEM.
    x3 = jax.random.normal(kx, (2, 8, 8, 16), dtype=jnp.bfloat16)
    out3 = jax.block_until_ready(drop_path(x3, 0.5, True, key=kmask))
    u3 = jax.random.uniform(kmask, (2,), dtype=jnp.float32)
    mask3 = jnp.floor(0.5 + u3).reshape(2, 1, 1, 1)
    ref3 = (x3.astype(jnp.float32) / 0.5 * mask3).astype(jnp.bfloat16)
    assert jnp.allclose(out3.astype(jnp.float32), ref3.astype(jnp.float32),
                        atol=1e-2, rtol=1e-2), "mismatch (bf16 path)"

    # Eval / drop_prob==0 path is identity.
    module.training = False
    out_eval = jax.block_until_ready(module(x, key=kmask))
    assert jnp.array_equal(out_eval, x)

    print("KERNEL_OK")
</pallas_src>

<mosaic_0001>
module attributes {stable_mosaic.version = 11 : i64} {
  func.func @_drop_path_kernel(%arg0: i32, %arg1: i32, %arg2: memref<2xf32, #tpu.memory_space<smem>>, %arg3: memref<1x8x128xf32, #tpu.memory_space<vmem>>, %arg4: memref<1x8x128xf32, #tpu.memory_space<vmem>>) attributes {dimension_semantics = [#tpu.dimension_semantics<parallel>, #tpu.dimension_semantics<parallel>], iteration_bounds = array<i64: 2, 1>, scalar_prefetch = 1 : i64, scratch_operands = 0 : i64, tpu.core_type = #tpu.core_type<tc>, window_params = [{transform_indices = @transform_0, window_bounds = array<i64: 1, 8, 128>}, {transform_indices = @transform_1, window_bounds = array<i64: 1, 8, 128>}]} {
    %c0 = arith.constant 0 : index
    %c0_0 = arith.constant 0 : index
    %c0_1 = arith.constant 0 : index
    %0 = vector.load %arg3[%c0, %c0_0, %c0_1] : memref<1x8x128xf32, #tpu.memory_space<vmem>>, vector<1x8x128xf32>
    %1 = arith.index_cast %arg0 : i32 to index
    %2 = memref.load %arg2[%1] : memref<2xf32, #tpu.memory_space<smem>>
    %3 = vector.broadcast %2 : f32 to vector<1x8x128xf32>
    %4 = arith.mulf %0, %3 : vector<1x8x128xf32>
    %c0_2 = arith.constant 0 : index
    %c0_3 = arith.constant 0 : index
    %c0_4 = arith.constant 0 : index
    %5 = vector.load %arg4[%c0_2, %c0_3, %c0_4] : memref<1x8x128xf32, #tpu.memory_space<vmem>>, vector<1x8x128xf32>
    tpu.vector_store %arg4[%c0_2, %c0_3, %c0_4], %4 {strides = array<i32>} : memref<1x8x128xf32, #tpu.memory_space<vmem>>, vector<1x8x128xf32>,
    return
  }
  func.func @transform_0(%arg0: i32, %arg1: i32, %arg2: memref<2xf32, #tpu.memory_space<smem>>) -> (i32, i32, i32) {
    %c0_i32 = arith.constant 0 : i32
    %c0_i32_0 = arith.constant 0 : i32
    return %arg0, %arg1, %c0_i32 : i32, i32, i32
  }
  func.func @transform_1(%arg0: i32, %arg1: i32, %arg2: memref<2xf32, #tpu.memory_space<smem>>) -> (i32, i32, i32) {
    %c0_i32 = arith.constant 0 : i32
    %c0_i32_0 = arith.constant 0 : i32
    return %arg0, %arg1, %c0_i32 : i32, i32, i32
  }
}

</mosaic_0001>

<llo_original>
// kernel: _scale_per_sample.1
$region0: #{_scale_per_sample.1}
  #allocation0 [shape = 'u32[]', space=smem, size = 0x4, offset = 0x4, fixed_abs, tag = 'smem constant byte address 0x4 - core index']
  #allocation1 [shape = 'u32[144,128]{1,0:T(1,128)}', space=vmem, size = 0x12000, scoped, tag = 'internal scratch']
  #allocation2 [shape = 's32[1]{0}', space=sflag, size = 0x4, scoped, tag = 'scoped memory for _scale_per_sample.1']
  #allocation3 [shape = 'u8[512]{0}', space=smem, size = 0x200, scoped, tag = 'prefetched SMEM operand 0']
  %s0 = inlined_call_operand.vmem [shape: f32[2], index: 0, kind: input, shape index: {}]
  %s1 = inlined_call_operand.vmem [shape: f32[2,8,128], index: 1, kind: input, shape index: {}, may-alias: {1,2}]
  %s2 = inlined_call_operand.vmem [shape: f32[2,8,128], index: 2, kind: output, shape index: {}, may-alias: {1,2}]
  %s3 = sld [smem:[#allocation0]]
  $region37: #{_scale_per_sample.1} parent=0
    _
  %s5 = ssub.s32 1, %s3
  %s6 = scalar_select 0, %s5, %s3
  %s7 = sshll.u32 %s0, 4
  %s8 = int_to_ptr.vmem [resolvable:$true] %s7
  %10 = dma.vmem_to_smem %s8, 16, [#allocation3], [#allocation2]
  %11 = dma.done [#allocation2], 16
  %12 = sfence
  loop: start=0, step=1, limit=4
  $region2: #{_scale_per_sample.1} parent=0 // loop_pre_header
    _
  $region3: #{_scale_per_sample.1} parent=0 // loop_header
    %s14 = sphi 0, %s18
    %p15 = scmp.ge.s32.totalorder %s14, 4
    %s21 = sphi 0, %s33
    %s22 = sphi 0, %s29
    %s23 = sphi 0, %s21
    %s24 = sphi 0, %s22
    %s25 = sphi 0, %s23
    %s26 = sphi 0, %s24
    %s38 = sphi 0, %s40
    %s41 = sphi 0, %s38
    %s42 = sphi 0, %s41
    %s58 = sphi 0, %s42
    %s66 = sphi 0, %s68
    %s69 = sphi 0, %s66
    %s70 = sphi 0, %s69
    %s86 = sphi 0, %s70
  $region4: #{_scale_per_sample.1} parent=0 // loop_header_branch
    %17 = sbr.rel (%p15) target = $region8
  $region5: #{_scale_per_sample.1} parent=0 // loop_body
    %s19 = ssub.s32 %s14, 1
    %s20 = ssub.s32 %s14, 2
    %s27 = sadd.s32 1, %s22
    %p28 = scmp.ge.s32.totalorder %s27, 1
    %s29 = scalar_select %p28, 0, %s27
    %s30 = sadd.s32 1, %s21
    %s31 = scalar_select %p28, %s30, %s21
    %p32 = scmp.ge.s32.totalorder %s31, 2
    %s33 = scalar_select %p32, 0, %s31
    %s34 = ssub.s32 %s21, %s33
    %s35 = ssub.s32 %s22, %s29
    %s36 = sor.u32 %s34, %s35
    %p37 = scmp.eq.s32.totalorder %s36, 0
    %s39 = sadd.s32 %s38, 1
    %s40 = scalar_select %p37, %s38, %s39
    %p43 = pneg %p37
    %p44 = scmp.eq.s32.totalorder %s14, 1
    %p45 = por %p43, %p44
    %p46 = scmp.ne.s32.totalorder %s38, %s41
    %p47 = scmp.eq.s32.totalorder %s14, 0
    %p48 = por %p46, %p47
    %p49 = scmp.ne.s32.totalorder %s38, %s41
    %p50 = scmp.eq.s32.totalorder %s19, 1
    %p51 = por %p49, %p50
    %p52 = scmp.ne.s32.totalorder %s41, %s42
    %p53 = scmp.eq.s32.totalorder %s19, 0
    %p54 = por %p52, %p53
    %p55 = scmp.ne.s32.totalorder %s41, %s42
    %p56 = scmp.eq.s32.totalorder %s20, 1
    %p57 = por %p55, %p56
    %p59 = scmp.ne.s32.totalorder %s42, %s58
    %p60 = scmp.eq.s32.totalorder %s20, 0
    %p61 = por %p59, %p60
    %s62 = ssub.s32 %s21, %s33
    %s63 = ssub.s32 %s22, %s29
    %s64 = sor.u32 %s62, %s63
    %p65 = scmp.eq.s32.totalorder %s64, 0
    %s67 = sadd.s32 %s66, 1
    %s68 = scalar_select %p65, %s66, %s67
    %p71 = pneg %p65
    %p72 = scmp.eq.s32.totalorder %s14, 1
    %p73 = por %p71, %p72
    %p74 = scmp.ne.s32.totalorder %s66, %s69
    %p75 = scmp.eq.s32.totalorder %s14, 0
    %p76 = por %p74, %p75
    %p77 = scmp.ne.s32.totalorder %s66, %s69
    %p78 = scmp.eq.s32.totalorder %s19, 1
    %p79 = por %p77, %p78
    %p80 = scmp.ne.s32.totalorder %s69, %s70
    %p81 = scmp.eq.s32.totalorder %s19, 0
    %p82 = por %p80, %p81
    %p83 = scmp.ne.s32.totalorder %s69, %s70
    %p84 = scmp.eq.s32.totalorder %s20, 1
    %p85 = por %p83, %p84
    %p87 = scmp.ne.s32.totalorder %s70, %s86
    %p88 = scmp.eq.s32.totalorder %s20, 0
    %p89 = por %p87, %p88
    %p90 = scmp.le.s32.totalorder 1, %s14
    %p91 = scmp.lt.s32.totalorder %s14, 3
    %p92 = pnand %p90, %p91
    %p93 = pneg %p92
    // Predicated region
    $region9: #{_scale_per_sample.1} parent=5 // pred_check
      _
    $region10: #{_scale_per_sample.1} parent=5 // pred_check_branch
      %95 = sbr.rel (%p92) target = $region12
    $region11: #{_scale_per_sample.1} parent=5 // pred_region
      %s96 = ssub.s32 %s14, 1
    $region12: #{_scale_per_sample.1} parent=5 // pred_fallthru
      _
    %p97 = scmp.lt.s32.totalorder %s14, 2
    // Predicated region
    $region13: #{_scale_per_sample.1} parent=5 // pred_check
      %p98 = pneg %p97
    $region14: #{_scale_per_sample.1} parent=5 // pred_check_branch
      %100 = sbr.rel (%p98) target = $region16
    $region15: #{_scale_per_sample.1} parent=5 // pred_region
      // Predicated region
      $region17: #{_scale_per_sample.1} parent=15 // pred_check
        %p101 = pneg %p48
      $region18: #{_scale_per_sample.1} parent=15 // pred_check_branch
        %103 = sbr.rel (%p101) target = $region20
      $region19: #{_scale_per_sample.1} parent=15 // pred_region
        %p104 = scmp.lt.s32.totalorder %s21, 1
        %s105 = scalar_select %p104, %s21, 1
        %p106 = scmp.lt.s32.totalorder %s22, 0
        %s107 = scalar_select %p106, %s22, 0
        %s108 = sadd.s32 %s107, %s105
        %s109 = smul.addr %s108, 8
        %s110 = scalar_lea.vmem %s1, %s109
      $region20: #{_scale_per_sample.1} parent=15 // pred_fallthru
        _
    $region16: #{_scale_per_sample.1} parent=5 // pred_fallthru
      _
    %p111 = scmp.le.s32.totalorder 1, %s14
    %p112 = scmp.lt.s32.totalorder %s14, 3
    %p113 = pnand %p111, %p112
    %p114 = pneg %p113
    // Predicated region
    $region21: #{_scale_per_sample.1} parent=5 // pred_check
      _
    $region22: #{_scale_per_sample.1} parent=5 // pred_check_branch
      %116 = sbr.rel (%p113) target = $region24
    $region23: #{_scale_per_sample.1} parent=5 // pred_region
      %s117 = ssub.s32 %s14, 1
      %p118 = scmp.lt.s32.totalorder %s23, 1
      %s119 = scalar_select %p118, %s23, 1
      %p120 = scmp.lt.s32.totalorder %s24, 0
      %s121 = scalar_select %p120, %s24, 0
      %s122 = sadd.s32 %s121, %s119
      %s123 = smul.addr %s122, 8
      %s124 = scalar_lea.vmem %s1, %s123
      %p125 = pneg %p54
      %p126 = pneg %p51
      %p127 = pneg %p82
      %p128 = pneg %p79
      %p129 = scmp.lt.s32.totalorder %s23, 1
      %s130 = scalar_select %p129, %s23, 1
      %p131 = scmp.lt.s32.totalorder %s24, 0
      %s132 = scalar_select %p131, %s24, 0
      %s133 = sadd.s32 %s132, %s130
      %s134 = smul.addr %s133, 8
      %s135 = scalar_lea.vmem %s2, %s134
      %p136 = scmp.lt.s32.totalorder %s23, 1
      %s137 = scalar_select %p136, %s23, 1
      %p138 = scmp.lt.s32.totalorder %s24, 0
      %s139 = scalar_select %p138, %s24, 0
      %s140 = sadd.s32 %s139, %s137
      %s141 = smul.addr %s140, 8
      %s142 = scalar_lea.vmem %s1, %s141
      %p143 = scmp.lt.s32.totalorder %s23, 1
      %s144 = scalar_select %p143, %s23, 1
      %p145 = scmp.lt.s32.totalorder %s24, 0
      %s146 = scalar_select %p145, %s24, 0
      %s147 = sadd.s32 %s146, %s144
      %s148 = smul.addr %s147, 8
      %s149 = scalar_lea.vmem %s2, %s148
      %v150 = vld [vmem:[%s142] sm:$0xff]
      %s151 = sld [smem:[#allocation3 + %s23]]
      %v152 = vstv %s151
      %v153 = vmul.f32 %v150, %v152
      %154 = vst [vmem:[%s149] sm:$0xff] %v153
      %p155 = scmp.lt.s32.totalorder %s23, 1
      %s156 = scalar_select %p155, %s23, 1
      %p157 = scmp.lt.s32.totalorder %s24, 0
      %s158 = scalar_select %p157, %s24, 0
      %s159 = sadd.s32 %s158, %s156
      %s160 = smul.addr %s159, 8
      %s161 = scalar_lea.vmem %s2, %s160
      // Predicated region
      $region25: #{_scale_per_sample.1} parent=23 // pred_check
        %p162 = pneg %p79
      $region26: #{_scale_per_sample.1} parent=23 // pred_check_branch
        %164 = sbr.rel (%p162) target = $region28
      $region27: #{_scale_per_sample.1} parent=23 // pred_region
        _
      $region28: #{_scale_per_sample.1} parent=23 // pred_fallthru
        _
    $region24: #{_scale_per_sample.1} parent=5 // pred_fallthru
      _
    %p165 = scmp.le.s32.totalorder 2, %s14
    // Predicated region
    $region29: #{_scale_per_sample.1} parent=5 // pred_check
      %p166 = pneg %p165
    $region30: #{_scale_per_sample.1} parent=5 // pred_check_branch
      %168 = sbr.rel (%p166) target = $region32
    $region31: #{_scale_per_sample.1} parent=5 // pred_region
      %s169 = ssub.s32 %s14, 2
      // Predicated region
      $region33: #{_scale_per_sample.1} parent=31 // pred_check
        %p170 = pneg %p85
      $region34: #{_scale_per_sample.1} parent=31 // pred_check_branch
        %172 = sbr.rel (%p170) target = $region36
      $region35: #{_scale_per_sample.1} parent=31 // pred_region
        %p173 = scmp.lt.s32.totalorder %s25, 1
        %s174 = scalar_select %p173, %s25, 1
        %p175 = scmp.lt.s32.totalorder %s26, 0
        %s176 = scalar_select %p175, %s26, 0
        %s177 = sadd.s32 %s176, %s174
        %s178 = smul.addr %s177, 8
        %s179 = scalar_lea.vmem %s2, %s178
      $region36: #{_scale_per_sample.1} parent=31 // pred_fallthru
        _
    $region32: #{_scale_per_sample.1} parent=5 // pred_fallthru
      _
  $region6: #{_scale_per_sample.1} parent=0 // loop_footer
    %s18 = sadd.s32 1, %s14
  $region7: #{_scale_per_sample.1} parent=0 // loop_footer_branch
    %13 = sbr.rel target = $region3
  $region8: #{_scale_per_sample.1} parent=0 // loop_exit
    _

</llo_original>
